<compile_context>
chip_gen: v7x
topology: tpu7x:2x2x1
jax: 0.10.0
libtpu: 0.0.40
codegen_flags: <defaults>
</compile_context>

<pallas_src>
import jax
import jax.numpy as jnp
import numpy as np
from jax.experimental import pallas as pl
from jax.experimental.pallas import tpu as pltpu

N_AGENTS = 5
STAT_DIM = 30        # per-agent statistics
AVAIL_DIM = 6
LVL1_DIM = 6
TGT_DIM = 10
LOC_DIM = 15         # obs[:, :, 52:67]
OBS_DIM = 67
ORIG_64 = 64
ORIG_32 = 32
ORIG_256 = 256
SCALAR_CONTEXT = 128
FUSED_DIM = ORIG_64 + 4 * ORIG_32        # 192 (fc_1 / fc_2 input width)
FLAT_DIM = N_AGENTS * OBS_DIM            # 335


# ---------------------------------------------------------------------------
# Kernel
# ---------------------------------------------------------------------------
def scalar_encoder_kernel(mask1_ref, mask2_ref, obs1_ref, obs2_ref,
                          w_emb_ref, b_emb_ref, w_ctx_ref, b_ctx_ref,
                          w_fc1_ref, b_fc1_ref, w_fc2_ref, b_fc2_ref,
                          emb_out_ref, ctx_out_ref):
    # ---- embedded_scalar branch: [TB, 335] -> [TB, 192] -> [TB, 256] ----
    o1 = obs1_ref[...]                                            # [TB, 335] f32
    # Elementwise path kept in f32 (v5e VPU/EUP have no bf16).  Padded rows of a
    # partial last batch tile may hold garbage, so log() can yield NaN there;
    # benign: matmul rows are independent and those rows are masked on store.
    x1 = jnp.where(mask1_ref[...] != 0.0, jnp.log(o1 + 1.0), o1)  # log1p on stat lanes
    h1 = jnp.maximum(
        jnp.dot(x1.astype(jnp.bfloat16), w_emb_ref[...],
                preferred_element_type=jnp.float32)
        + b_emb_ref[...], 0.0)                                    # [TB, 192] f32
    emb_out_ref[...] = jnp.maximum(
        jnp.dot(h1.astype(jnp.bfloat16), w_fc1_ref[...],
                preferred_element_type=jnp.float32)
        + b_fc1_ref[...], 0.0)                                    # [TB, 256]

    # ---- scalar_context branch: [TB*5, 67] -> [TB*5, 192] -> [TB*5, 128] ----
    o2 = obs2_ref[...]                                            # [TB*5, 67] f32
    x2 = jnp.where(mask2_ref[...] != 0.0, jnp.log(o2 + 1.0), o2)  # precomputed lane mask
    h2 = jnp.maximum(
        jnp.dot(x2.astype(jnp.bfloat16), w_ctx_ref[...],
                preferred_element_type=jnp.float32)
        + b_ctx_ref[...], 0.0)                                    # [TB*5, 192] f32
    ctx_out_ref[...] = jnp.maximum(
        jnp.dot(h2.astype(jnp.bfloat16), w_fc2_ref[...],
                preferred_element_type=jnp.float32)
        + b_fc2_ref[...], 0.0)                                    # [TB*5, 128]


# ---------------------------------------------------------------------------
# Host-side fusion of the 12 Linear layers into block-diagonal weights (bf16)
# ---------------------------------------------------------------------------
def fuse_params(params):
    """params: list of 12 (W[in,out], b[out]) pairs (same order as PyTorch module)."""
    (w_stat_e, b_stat_e), (w_stat, b_stat) = params[0], params[1]
    (w_av_e, b_av_e), (w_av, b_av) = params[2], params[3]
    (w_l1_e, b_l1_e), (w_l1, b_l1) = params[4], params[5]
    (w_tg_e, b_tg_e), (w_tg, b_tg) = params[6], params[7]
    (w_lo_e, b_lo_e), (w_lo, b_lo) = params[8], params[9]
    (w_fc1, b_fc1), (w_fc2, b_fc2) = params[10], params[11]

    # embedded-scalar fused weight: [5*67, 192]
    # (agent-specific blocks for statistics; replicated blocks implement the
    # sum-over-agents for the other four branches)
    w_emb = jnp.zeros((FLAT_DIM, FUSED_DIM), jnp.float32)
    for a in range(N_AGENTS):
        base = a * OBS_DIM
        w_emb = w_emb.at[base + 0:base + 30, 0:64].set(w_stat_e[a * 30:(a + 1) * 30])
        w_emb = w_emb.at[base + 30:base + 36, 64:96].set(w_av_e)
        w_emb = w_emb.at[base + 36:base + 42, 96:128].set(w_l1_e)
        w_emb = w_emb.at[base + 42:base + 52, 128:160].set(w_tg_e)
        w_emb = w_emb.at[base + 52:base + 67, 160:192].set(w_lo_e)
    b_emb = jnp.concatenate([b_stat_e, b_av_e, b_l1_e, b_tg_e, b_lo_e]).reshape(1, -1)

    # scalar-context fused weight: [67, 192]
    w_ctx = jnp.zeros((OBS_DIM, FUSED_DIM), jnp.float32)
    w_ctx = w_ctx.at[0:30, 0:64].set(w_stat)
    w_ctx = w_ctx.at[30:36, 64:96].set(w_av)
    w_ctx = w_ctx.at[36:42, 96:128].set(w_l1)
    w_ctx = w_ctx.at[42:52, 128:160].set(w_tg)
    w_ctx = w_ctx.at[52:67, 160:192].set(w_lo)
    b_ctx = jnp.concatenate([b_stat, b_av, b_l1, b_tg, b_lo]).reshape(1, -1)

    # lane masks: 1.0 on statistics lanes (log1p applied only there)
    m1 = np.zeros((1, FLAT_DIM), np.float32)
    for a in range(N_AGENTS):
        m1[0, a * OBS_DIM:a * OBS_DIM + STAT_DIM] = 1.0
    mask1 = jnp.asarray(m1)
    m2 = np.zeros((1, OBS_DIM), np.float32)
    m2[0, :STAT_DIM] = 1.0
    mask2 = jnp.asarray(m2)

    bf16 = jnp.bfloat16
    return (mask1, mask2,
            w_emb.astype(bf16), b_emb, w_ctx.astype(bf16), b_ctx,
            w_fc1.astype(bf16), b_fc1.reshape(1, -1),
            w_fc2.astype(bf16), b_fc2.reshape(1, -1))


# ---------------------------------------------------------------------------
# Wrapper
# ---------------------------------------------------------------------------
def _pick_batch_tile(B, batch_tile):
    tb = min(batch_tile, B)
    # v7x shards the "parallel" batch axis across its two TensorCores: keep at
    # least 2 grid steps whenever the batch allows it (free on v5e/v6e).
    if B >= 16:
        tb = min(tb, max(8, (B // 2) // 8 * 8))
    if tb >= 8:
        tb = (tb // 8) * 8      # keep TB (and TB*5) sublane-friendly
    return max(tb, 1)


def scalar_encoder(obs, fused, *, batch_tile=256):
    """obs: [B, 5, 67] float32. fused: output of fuse_params()."""
    B = obs.shape[0]
    TB = _pick_batch_tile(B, batch_tile)
    grid = (pl.cdiv(B, TB),)

    # Free (contiguous) host-side views of the same observation buffer.
    obs1 = obs.reshape(B, FLAT_DIM)              # [B, 335]
    obs2 = obs.reshape(B * N_AGENTS, OBS_DIM)    # [B*5, 67]

    (mask1, mask2, w_emb, b_emb, w_ctx, b_ctx,
     w_fc1, b_fc1, w_fc2, b_fc2) = fused

    const = lambda i: (0, 0)
    in_specs = [
        pl.BlockSpec((1, FLAT_DIM), const),                         # mask1 (resident)
        pl.BlockSpec((1, OBS_DIM), const),                          # mask2 (resident)
        pl.BlockSpec((TB, FLAT_DIM), lambda i: (i, 0)),             # obs flat view
        pl.BlockSpec((TB * N_AGENTS, OBS_DIM), lambda i: (i, 0)),   # obs per-agent view
        pl.BlockSpec(w_emb.shape, const),
        pl.BlockSpec(b_emb.shape, const),
        pl.BlockSpec(w_ctx.shape, const),
        pl.BlockSpec(b_ctx.shape, const),
        pl.BlockSpec(w_fc1.shape, const),
        pl.BlockSpec(b_fc1.shape, const),
        pl.BlockSpec(w_fc2.shape, const),
        pl.BlockSpec(b_fc2.shape, const),
    ]
    out_specs = (
        pl.BlockSpec((TB, ORIG_256), lambda i: (i, 0)),
        pl.BlockSpec((TB * N_AGENTS, SCALAR_CONTEXT), lambda i: (i, 0)),
    )
    out_shape = (
        jax.ShapeDtypeStruct((B, ORIG_256), jnp.float32),
        jax.ShapeDtypeStruct((B * N_AGENTS, SCALAR_CONTEXT), jnp.float32),
    )

    flops = 2 * B * (FLAT_DIM * FUSED_DIM                      # fused emb matmul
                     + FUSED_DIM * ORIG_256                    # fc_1
                     + N_AGENTS * OBS_DIM * FUSED_DIM          # fused ctx matmul
                     + N_AGENTS * FUSED_DIM * SCALAR_CONTEXT)  # fc_2
    transcendentals = 2 * B * FLAT_DIM
    bytes_accessed = (4 * 2 * B * FLAT_DIM                              # obs (two f32 views)
                      + 2 * (FLAT_DIM + OBS_DIM) * FUSED_DIM            # bf16 fused weights
                      + 2 * FUSED_DIM * (ORIG_256 + SCALAR_CONTEXT)     # bf16 fc weights
                      + 4 * (2 * FUSED_DIM + ORIG_256 + SCALAR_CONTEXT  # f32 biases + masks
                             + FLAT_DIM + OBS_DIM)
                      + 4 * B * (ORIG_256 + N_AGENTS * SCALAR_CONTEXT))  # f32 outputs

    emb_out, ctx_out = pl.pallas_call(
        scalar_encoder_kernel,
        out_shape=out_shape,
        grid=grid,
        in_specs=in_specs,
        out_specs=out_specs,
        compiler_params=pltpu.CompilerParams(
            dimension_semantics=("parallel",),
            vmem_limit_bytes=32 * 1024 * 1024),
        cost_estimate=pl.CostEstimate(
            flops=flops, transcendentals=transcendentals,
            bytes_accessed=bytes_accessed),
    )(mask1, mask2, obs1, obs2, w_emb, b_emb, w_ctx, b_ctx,
      w_fc1, b_fc1, w_fc2, b_fc2)

    return emb_out, ctx_out.reshape(B, N_AGENTS, SCALAR_CONTEXT)


# ---------------------------------------------------------------------------
# Deterministic params + pure-JAX reference (validation)
# ---------------------------------------------------------------------------
def init_params(key):
    """Deterministic Linear params; (W transposed to [in, out], b)."""
    dims = [
        (N_AGENTS * STAT_DIM, ORIG_64),   # statistics_fc_emb
        (STAT_DIM, ORIG_64),              # statistics_fc
        (AVAIL_DIM, ORIG_32),             # available_actions_fc_emb
        (AVAIL_DIM, ORIG_32),             # available_actions_fc
        (LVL1_DIM, ORIG_32),              # last_levele1_action_fc_emb
        (LVL1_DIM, ORIG_32),              # last_levele1_action_fc
        (TGT_DIM, ORIG_32),               # last_target_fc_emb
        (TGT_DIM, ORIG_32),               # last_target_fc
        (LOC_DIM, ORIG_32),               # last_location_fc_emb
        (LOC_DIM, ORIG_32),               # last_location_fc
        (FUSED_DIM, ORIG_256),            # fc_1
        (FUSED_DIM, SCALAR_CONTEXT),      # fc_2
    ]
    params = []
    for i, (din, dout) in enumerate(dims):
        kw, kb = jax.random.split(jax.random.fold_in(key, i))
        bound = 1.0 / (din ** 0.5)
        w = jax.random.uniform(kw, (din, dout), jnp.float32, -bound, bound)
        b = jax.random.uniform(kb, (dout,), jnp.float32, -bound, bound)
        params.append((w, b))
    return params


def reference(obs, params):
    """Pure-JAX f32 reference mirroring the PyTorch forward."""
    stat = obs[:, :, :30]
    avail = obs[:, :, 30:36]
    lvl1 = obs[:, :, 36:42]
    tgt = obs[:, :, 42:52]
    loc = obs[:, :, 52:67]
    B = obs.shape[0]

    def lin(x, p):
        return jax.nn.relu(x @ p[0] + p[1])

    log_stat = jnp.log(stat + 1.0)
    emb_list = [lin(log_stat.reshape(B, -1), params[0])]
    ctx_list = [lin(log_stat, params[1])]
    for x3d, pe, p in [(avail, params[2], params[3]),
                       (lvl1, params[4], params[5]),
                       (tgt, params[6], params[7]),
                       (loc, params[8], params[9])]:
        emb_list.append(lin(jnp.sum(x3d, axis=1), pe))
        ctx_list.append(lin(x3d, p))
    emb = jnp.concatenate(emb_list, axis=1)
    ctx = jnp.concatenate(ctx_list, axis=2)
    return lin(emb, params[10]), lin(ctx, params[11])


if __name__ == "__main__":
    key = jax.random.PRNGKey(0)
    kobs, kparam = jax.random.split(key)
    params = init_params(kparam)
    fused = fuse_params(params)

    # bf16 MXU operands vs f32 reference -> re-baselined tolerance.
    ATOL = RTOL = 2e-2

    # Small tiles: tiny batch, sublane-aligned batch, non-multiple-of-tile batch
    # (exercises the partial last grid block).
    for B in (2, 8, 12):
        obs = jax.random.uniform(jax.random.fold_in(kobs, B),
                                 (B, N_AGENTS, OBS_DIM), jnp.float32)
        emb_out, ctx_out = scalar_encoder(obs, fused, batch_tile=8)
        jax.block_until_ready((emb_out, ctx_out))

        ref_emb, ref_ctx = reference(obs, params)
        assert emb_out.shape == (B, ORIG_256)
        assert ctx_out.shape == (B, N_AGENTS, SCALAR_CONTEXT)
        assert jnp.allclose(emb_out, ref_emb, atol=ATOL, rtol=RTOL), f"emb mismatch B={B}"
        assert jnp.allclose(ctx_out, ref_ctx, atol=ATOL, rtol=RTOL), f"ctx mismatch B={B}"

    # Default tiling path: exercises the >=2-grid-step cap (B=32 -> TB=16, grid=2).
    B = 32
    obs = jax.random.uniform(jax.random.fold_in(kobs, B),
                             (B, N_AGENTS, OBS_DIM), jnp.float32)
    emb_out, ctx_out = scalar_encoder(obs, fused)
    jax.block_until_ready((emb_out, ctx_out))
    ref_emb, ref_ctx = reference(obs, params)
    assert jnp.allclose(emb_out, ref_emb, atol=ATOL, rtol=RTOL), "emb mismatch B=32"
    assert jnp.allclose(ctx_out, ref_ctx, atol=ATOL, rtol=RTOL), "ctx mismatch B=32"

    print("KERNEL_OK")
</pallas_src>

<mosaic_0001>
module attributes {stable_mosaic.version = 11 : i64} {
  func.func @scalar_encoder_kernel(%arg0: i32, %arg1: memref<1x335xf32, #tpu.memory_space<vmem>>, %arg2: memref<1x67xf32, #tpu.memory_space<vmem>>, %arg3: memref<2x335xf32, #tpu.memory_space<vmem>>, %arg4: memref<10x67xf32, #tpu.memory_space<vmem>>, %arg5: memref<335x192xbf16, #tpu.memory_space<vmem>>, %arg6: memref<1x192xf32, #tpu.memory_space<vmem>>, %arg7: memref<67x192xbf16, #tpu.memory_space<vmem>>, %arg8: memref<1x192xf32, #tpu.memory_space<vmem>>, %arg9: memref<192x256xbf16, #tpu.memory_space<vmem>>, %arg10: memref<1x256xf32, #tpu.memory_space<vmem>>, %arg11: memref<192x128xbf16, #tpu.memory_space<vmem>>, %arg12: memref<1x128xf32, #tpu.memory_space<vmem>>, %arg13: memref<2x256xf32, #tpu.memory_space<vmem>>, %arg14: memref<10x128xf32, #tpu.memory_space<vmem>>) attributes {dimension_semantics = [#tpu.dimension_semantics<parallel>], iteration_bounds = array<i64: 1>, scalar_prefetch = 0 : i64, scratch_operands = 0 : i64, tpu.core_type = #tpu.core_type<tc>, window_params = [{pipeline_mode = #tpu.pipeline_mode<synchronous>, transform_indices = @transform_0, window_bounds = array<i64: 1, 335>}, {pipeline_mode = #tpu.pipeline_mode<synchronous>, transform_indices = @transform_1, window_bounds = array<i64: 1, 67>}, {transform_indices = @transform_2, window_bounds = array<i64: 2, 335>}, {transform_indices = @transform_3, window_bounds = array<i64: 10, 67>}, {pipeline_mode = #tpu.pipeline_mode<synchronous>, transform_indices = @transform_4, window_bounds = array<i64: 335, 192>}, {pipeline_mode = #tpu.pipeline_mode<synchronous>, transform_indices = @transform_5, window_bounds = array<i64: 1, 192>}, {pipeline_mode = #tpu.pipeline_mode<synchronous>, transform_indices = @transform_6, window_bounds = array<i64: 67, 192>}, {pipeline_mode = #tpu.pipeline_mode<synchronous>, transform_indices = @transform_7, window_bounds = array<i64: 1, 192>}, {pipeline_mode = #tpu.pipeline_mode<synchronous>, transform_indices = @transform_8, window_bounds = array<i64: 192, 256>}, {pipeline_mode = #tpu.pipeline_mode<synchronous>, transform_indices = @transform_9, window_bounds = array<i64: 1, 256>}, {pipeline_mode = #tpu.pipeline_mode<synchronous>, transform_indices = @transform_10, window_bounds = array<i64: 192, 128>}, {pipeline_mode = #tpu.pipeline_mode<synchronous>, transform_indices = @transform_11, window_bounds = array<i64: 1, 128>}, {transform_indices = @transform_12, window_bounds = array<i64: 2, 256>}, {transform_indices = @transform_13, window_bounds = array<i64: 10, 128>}]} {
    %c0 = arith.constant 0 : index
    %c0_0 = arith.constant 0 : index
    %0 = vector.load %arg3[%c0, %c0_0] : memref<2x335xf32, #tpu.memory_space<vmem>>, vector<2x335xf32>
    %c0_1 = arith.constant 0 : index
    %c0_2 = arith.constant 0 : index
    %1 = vector.load %arg1[%c0_1, %c0_2] : memref<1x335xf32, #tpu.memory_space<vmem>>, vector<1x335xf32>
    %cst = arith.constant 0.000000e+00 : f32
    %2 = vector.broadcast %cst : f32 to vector<1x335xf32>
    %3 = arith.cmpf one, %1, %2 : vector<1x335xf32>
    %cst_3 = arith.constant 1.000000e+00 : f32
    %4 = vector.broadcast %cst_3 : f32 to vector<2x335xf32>
    %5 = arith.addf %0, %4 : vector<2x335xf32>
    %6 = math.log %5 : vector<2x335xf32>
    %7 = vector.shape_cast %3 : vector<1x335xi1> to vector<1x335xi1>
    %8 = vector.broadcast %7 : vector<1x335xi1> to vector<2x335xi1>
    %9 = arith.select %8, %6, %0 : vector<2x335xi1>, vector<2x335xf32>
    %10 = arith.truncf %9 : vector<2x335xf32> to vector<2x335xbf16>
    %c0_4 = arith.constant 0 : index
    %c0_5 = arith.constant 0 : index
    %11 = vector.load %arg5[%c0_4, %c0_5] : memref<335x192xbf16, #tpu.memory_space<vmem>>, vector<335x192xbf16>
    %cst_6 = arith.constant dense<0.000000e+00> : vector<2x192xf32>
    %12 = tpu.matmul %10, %11, %cst_6 {dimension_numbers = #tpu.dot_dimension_numbers<[1], [0], [0], [1], [0, 0, 1, 1], [], []>} : vector<2x335xbf16>, vector<335x192xbf16>, vector<2x192xf32> -> vector<2x192xf32>
    %c0_7 = arith.constant 0 : index
    %c0_8 = arith.constant 0 : index
    %13 = vector.load %arg6[%c0_7, %c0_8] : memref<1x192xf32, #tpu.memory_space<vmem>>, vector<1x192xf32>
    %14 = vector.broadcast %13 : vector<1x192xf32> to vector<2x192xf32>
    %15 = arith.addf %12, %14 : vector<2x192xf32>
    %cst_9 = arith.constant 0.000000e+00 : f32
    %16 = vector.broadcast %cst_9 : f32 to vector<2x192xf32>
    %17 = arith.maximumf %15, %16 : vector<2x192xf32>
    %18 = arith.truncf %17 : vector<2x192xf32> to vector<2x192xbf16>
    %c0_10 = arith.constant 0 : index
    %c0_11 = arith.constant 0 : index
    %19 = vector.load %arg9[%c0_10, %c0_11] : memref<192x256xbf16, #tpu.memory_space<vmem>>, vector<192x256xbf16>
    %cst_12 = arith.constant dense<0.000000e+00> : vector<2x256xf32>
    %20 = tpu.matmul %18, %19, %cst_12 {dimension_numbers = #tpu.dot_dimension_numbers<[1], [0], [0], [1], [0, 0, 1, 1], [], []>} : vector<2x192xbf16>, vector<192x256xbf16>, vector<2x256xf32> -> vector<2x256xf32>
    %c0_13 = arith.constant 0 : index
    %c0_14 = arith.constant 0 : index
    %21 = vector.load %arg10[%c0_13, %c0_14] : memref<1x256xf32, #tpu.memory_space<vmem>>, vector<1x256xf32>
    %22 = vector.broadcast %21 : vector<1x256xf32> to vector<2x256xf32>
    %23 = arith.addf %20, %22 : vector<2x256xf32>
    %cst_15 = arith.constant 0.000000e+00 : f32
    %24 = vector.broadcast %cst_15 : f32 to vector<2x256xf32>
    %25 = arith.maximumf %23, %24 : vector<2x256xf32>
    %c0_16 = arith.constant 0 : index
    %c0_17 = arith.constant 0 : index
    %26 = vector.load %arg13[%c0_16, %c0_17] : memref<2x256xf32, #tpu.memory_space<vmem>>, vector<2x256xf32>
    tpu.vector_store %arg13[%c0_16, %c0_17], %25 {strides = array<i32>} : memref<2x256xf32, #tpu.memory_space<vmem>>, vector<2x256xf32>,
    %c0_18 = arith.constant 0 : index
    %c0_19 = arith.constant 0 : index
    %27 = vector.load %arg4[%c0_18, %c0_19] : memref<10x67xf32, #tpu.memory_space<vmem>>, vector<10x67xf32>
    %c0_20 = arith.constant 0 : index
    %c0_21 = arith.constant 0 : index
    %28 = vector.load %arg2[%c0_20, %c0_21] : memref<1x67xf32, #tpu.memory_space<vmem>>, vector<1x67xf32>
    %cst_22 = arith.constant 0.000000e+00 : f32
    %29 = vector.broadcast %cst_22 : f32 to vector<1x67xf32>
    %30 = arith.cmpf one, %28, %29 : vector<1x67xf32>
    %cst_23 = arith.constant 1.000000e+00 : f32
    %31 = vector.broadcast %cst_23 : f32 to vector<10x67xf32>
    %32 = arith.addf %27, %31 : vector<10x67xf32>
    %33 = math.log %32 : vector<10x67xf32>
    %34 = vector.shape_cast %30 : vector<1x67xi1> to vector<1x67xi1>
    %35 = vector.broadcast %34 : vector<1x67xi1> to vector<10x67xi1>
    %36 = arith.select %35, %33, %27 : vector<10x67xi1>, vector<10x67xf32>
    %37 = arith.truncf %36 : vector<10x67xf32> to vector<10x67xbf16>
    %c0_24 = arith.constant 0 : index
    %c0_25 = arith.constant 0 : index
    %38 = vector.load %arg7[%c0_24, %c0_25] : memref<67x192xbf16, #tpu.memory_space<vmem>>, vector<67x192xbf16>
    %cst_26 = arith.constant dense<0.000000e+00> : vector<10x192xf32>
    %39 = tpu.matmul %37, %38, %cst_26 {dimension_numbers = #tpu.dot_dimension_numbers<[1], [0], [0], [1], [0, 0, 1, 1], [], []>} : vector<10x67xbf16>, vector<67x192xbf16>, vector<10x192xf32> -> vector<10x192xf32>
    %c0_27 = arith.constant 0 : index
    %c0_28 = arith.constant 0 : index
    %40 = vector.load %arg8[%c0_27, %c0_28] : memref<1x192xf32, #tpu.memory_space<vmem>>, vector<1x192xf32>
    %41 = vector.broadcast %40 : vector<1x192xf32> to vector<10x192xf32>
    %42 = arith.addf %39, %41 : vector<10x192xf32>
    %cst_29 = arith.constant 0.000000e+00 : f32
    %43 = vector.broadcast %cst_29 : f32 to vector<10x192xf32>
    %44 = arith.maximumf %42, %43 : vector<10x192xf32>
    %45 = arith.truncf %44 : vector<10x192xf32> to vector<10x192xbf16>
    %c0_30 = arith.constant 0 : index
    %c0_31 = arith.constant 0 : index
    %46 = vector.load %arg11[%c0_30, %c0_31] : memref<192x128xbf16, #tpu.memory_space<vmem>>, vector<192x128xbf16>
    %cst_32 = arith.constant dense<0.000000e+00> : vector<10x128xf32>
    %47 = tpu.matmul %45, %46, %cst_32 {dimension_numbers = #tpu.dot_dimension_numbers<[1], [0], [0], [1], [0, 0, 1, 1], [], []>} : vector<10x192xbf16>, vector<192x128xbf16>, vector<10x128xf32> -> vector<10x128xf32>
    %c0_33 = arith.constant 0 : index
    %c0_34 = arith.constant 0 : index
    %48 = vector.load %arg12[%c0_33, %c0_34] : memref<1x128xf32, #tpu.memory_space<vmem>>, vector<1x128xf32>
    %49 = vector.broadcast %48 : vector<1x128xf32> to vector<10x128xf32>
    %50 = arith.addf %47, %49 : vector<10x128xf32>
    %cst_35 = arith.constant 0.000000e+00 : f32
    %51 = vector.broadcast %cst_35 : f32 to vector<10x128xf32>
    %52 = arith.maximumf %50, %51 : vector<10x128xf32>
    %c0_36 = arith.constant 0 : index
    %c0_37 = arith.constant 0 : index
    %53 = vector.load %arg14[%c0_36, %c0_37] : memref<10x128xf32, #tpu.memory_space<vmem>>, vector<10x128xf32>
    tpu.vector_store %arg14[%c0_36, %c0_37], %52 {strides = array<i32>} : memref<10x128xf32, #tpu.memory_space<vmem>>, vector<10x128xf32>,
    return
  }
  func.func @transform_0(%arg0: i32) -> (i32, i32) {
    %c0_i32 = arith.constant 0 : i32
    %c0_i32_0 = arith.constant 0 : i32
    %c0_i32_1 = arith.constant 0 : i32
    return %c0_i32, %c0_i32_0 : i32, i32
  }
  func.func @transform_1(%arg0: i32) -> (i32, i32) {
    %c0_i32 = arith.constant 0 : i32
    %c0_i32_0 = arith.constant 0 : i32
    %c0_i32_1 = arith.constant 0 : i32
    return %c0_i32, %c0_i32_0 : i32, i32
  }
  func.func @transform_2(%arg0: i32) -> (i32, i32) {
    %c0_i32 = arith.constant 0 : i32
    %c0_i32_0 = arith.constant 0 : i32
    return %arg0, %c0_i32 : i32, i32
  }
  func.func @transform_3(%arg0: i32) -> (i32, i32) {
    %c0_i32 = arith.constant 0 : i32
    %c0_i32_0 = arith.constant 0 : i32
    return %arg0, %c0_i32 : i32, i32
  }
  func.func @transform_4(%arg0: i32) -> (i32, i32) {
    %c0_i32 = arith.constant 0 : i32
    %c0_i32_0 = arith.constant 0 : i32
    %c0_i32_1 = arith.constant 0 : i32
    return %c0_i32, %c0_i32_0 : i32, i32
  }
  func.func @transform_5(%arg0: i32) -> (i32, i32) {
    %c0_i32 = arith.constant 0 : i32
    %c0_i32_0 = arith.constant 0 : i32
    %c0_i32_1 = arith.constant 0 : i32
    return %c0_i32, %c0_i32_0 : i32, i32
  }
  func.func @transform_6(%arg0: i32) -> (i32, i32) {
    %c0_i32 = arith.constant 0 : i32
    %c0_i32_0 = arith.constant 0 : i32
    %c0_i32_1 = arith.constant 0 : i32
    return %c0_i32, %c0_i32_0 : i32, i32
  }
  func.func @transform_7(%arg0: i32) -> (i32, i32) {
    %c0_i32 = arith.constant 0 : i32
    %c0_i32_0 = arith.constant 0 : i32
    %c0_i32_1 = arith.constant 0 : i32
    return %c0_i32, %c0_i32_0 : i32, i32
  }
  func.func @transform_8(%arg0: i32) -> (i32, i32) {
    %c0_i32 = arith.constant 0 : i32
    %c0_i32_0 = arith.constant 0 : i32
    %c0_i32_1 = arith.constant 0 : i32
    return %c0_i32, %c0_i32_0 : i32, i32
  }
  func.func @transform_9(%arg0: i32) -> (i32, i32) {
    %c0_i32 = arith.constant 0 : i32
    %c0_i32_0 = arith.constant 0 : i32
    %c0_i32_1 = arith.constant 0 : i32
    return %c0_i32, %c0_i32_0 : i32, i32
  }
  func.func @transform_10(%arg0: i32) -> (i32, i32) {
    %c0_i32 = arith.constant 0 : i32
    %c0_i32_0 = arith.constant 0 : i32
    %c0_i32_1 = arith.constant 0 : i32
    return %c0_i32, %c0_i32_0 : i32, i32
  }
  func.func @transform_11(%arg0: i32) -> (i32, i32) {
    %c0_i32 = arith.constant 0 : i32
    %c0_i32_0 = arith.constant 0 : i32
    %c0_i32_1 = arith.constant 0 : i32
    return %c0_i32, %c0_i32_0 : i32, i32
  }
  func.func @transform_12(%arg0: i32) -> (i32, i32) {
    %c0_i32 = arith.constant 0 : i32
    %c0_i32_0 = arith.constant 0 : i32
    return %arg0, %c0_i32 : i32, i32
  }
  func.func @transform_13(%arg0: i32) -> (i32, i32) {
    %c0_i32 = arith.constant 0 : i32
    %c0_i32_0 = arith.constant 0 : i32
    return %arg0, %c0_i32 : i32, i32
  }
}

</mosaic_0001>

<llo_original>
// kernel: tpu_custom_call.1
$region0: #{tpu_custom_call.1}
  #allocation0 [shape = 'u32[]', space=smem, size = 0x4, offset = 0x4, fixed_abs, tag = 'smem constant byte address 0x4 - core index']
  #allocation1 [shape = 'u32[144,128]{1,0:T(1,128)}', space=vmem, size = 0x12000, scoped, tag = 'internal scratch']
  %s0 = inlined_call_operand.vmem [shape: f32[1,335], index: 0, kind: input, shape index: {}]
  %s1 = inlined_call_operand.vmem [shape: f32[1,67], index: 1, kind: input, shape index: {}]
  %s2 = inlined_call_operand.vmem [shape: f32[2,335], index: 2, kind: input, shape index: {}]
  %s3 = inlined_call_operand.vmem [shape: f32[10,67], index: 3, kind: input, shape index: {}]
  %s4 = inlined_call_operand.vmem [shape: bf16[335,192], index: 4, kind: input, shape index: {}]
  %s5 = inlined_call_operand.vmem [shape: f32[1,192], index: 5, kind: input, shape index: {}]
  %s6 = inlined_call_operand.vmem [shape: bf16[67,192], index: 6, kind: input, shape index: {}]
  %s7 = inlined_call_operand.vmem [shape: f32[1,192], index: 7, kind: input, shape index: {}]
  %s8 = inlined_call_operand.vmem [shape: bf16[192,256], index: 8, kind: input, shape index: {}]
  %s9 = inlined_call_operand.vmem [shape: f32[1,256], index: 9, kind: input, shape index: {}]
  %s10 = inlined_call_operand.vmem [shape: bf16[192,128], index: 10, kind: input, shape index: {}]
  %s11 = inlined_call_operand.vmem [shape: f32[1,128], index: 11, kind: input, shape index: {}]
  %s12 = inlined_call_operand.hbm [shape: f32[2,256], index: 12, kind: output, shape index: {0}]
  %s13 = inlined_call_operand.hbm [shape: f32[10,128], index: 13, kind: output, shape index: {1}]
  %14 = xla_tuple %s12, %s13
  %s15 = sld [smem:[#allocation0]]
  $region66: #{tpu_custom_call.1} parent=0
    _
  %s17 = ssub.s32 1, %s15
  %s18 = scalar_select 0, %s17, %s15
  $region1: #{tpu_custom_call.1} parent=0
    #allocation2 [shape = 'u8[2048]{0}', space=vmem, size = 0x800, scoped, tag = 'output window, operand 0, single buffered']
    #allocation3 [shape = 's32[1]{0}', space=sflag, size = 0x4, scoped, tag = 'scoped memory for tpu_custom_call.1']
    #allocation4 [shape = 'u8[8192]{0}', space=vmem, size = 0x2000, scoped, tag = 'output window, operand 1, single buffered']
    #allocation5 [shape = 's32[1]{0}', space=sflag, size = 0x4, scoped, tag = 'scoped memory for tpu_custom_call.1']
    %19 = vsyncpa [#allocation3], 0
    %20 = vsyncpa [#allocation5], 0
    // Predicated region
    $region2: #{tpu_custom_call.1} parent=1 // pred_check
      _
    $region3: #{tpu_custom_call.1} parent=1 // pred_check_branch
      %22 = sbr.rel (0) target = $region5
    $region4: #{tpu_custom_call.1} parent=1 // pred_region
      _
    $region5: #{tpu_custom_call.1} parent=1 // pred_fallthru
      _
    // Predicated region
    $region6: #{tpu_custom_call.1} parent=1 // pred_check
      _
    $region7: #{tpu_custom_call.1} parent=1 // pred_check_branch
      %24 = sbr.rel (0) target = $region9
    $region8: #{tpu_custom_call.1} parent=1 // pred_region
      _
    $region9: #{tpu_custom_call.1} parent=1 // pred_fallthru
      _
    // Predicated region
    $region10: #{tpu_custom_call.1} parent=1 // pred_check
      _
    $region11: #{tpu_custom_call.1} parent=1 // pred_check_branch
      %26 = sbr.rel (0) target = $region13
    $region12: #{tpu_custom_call.1} parent=1 // pred_region
      _
    $region13: #{tpu_custom_call.1} parent=1 // pred_fallthru
      _
    // Predicated region
    $region14: #{tpu_custom_call.1} parent=1 // pred_check
      _
    $region15: #{tpu_custom_call.1} parent=1 // pred_check_branch
      %28 = sbr.rel (0) target = $region17
    $region16: #{tpu_custom_call.1} parent=1 // pred_region
      _
    $region17: #{tpu_custom_call.1} parent=1 // pred_fallthru
      _
    // Predicated region
    $region18: #{tpu_custom_call.1} parent=1 // pred_check
      _
    $region19: #{tpu_custom_call.1} parent=1 // pred_check_branch
      %30 = sbr.rel (0) target = $region21
    $region20: #{tpu_custom_call.1} parent=1 // pred_region
      _
    $region21: #{tpu_custom_call.1} parent=1 // pred_fallthru
      _
    // Predicated region
    $region22: #{tpu_custom_call.1} parent=1 // pred_check
      _
    $region23: #{tpu_custom_call.1} parent=1 // pred_check_branch
      %32 = sbr.rel (0) target = $region25
    $region24: #{tpu_custom_call.1} parent=1 // pred_region
      _
    $region25: #{tpu_custom_call.1} parent=1 // pred_fallthru
      _
    // Predicated region
    $region26: #{tpu_custom_call.1} parent=1 // pred_check
      _
    $region27: #{tpu_custom_call.1} parent=1 // pred_check_branch
      %34 = sbr.rel (0) target = $region29
    $region28: #{tpu_custom_call.1} parent=1 // pred_region
      _
    $region29: #{tpu_custom_call.1} parent=1 // pred_fallthru
      _
    // Predicated region
    $region30: #{tpu_custom_call.1} parent=1 // pred_check
      _
    $region31: #{tpu_custom_call.1} parent=1 // pred_check_branch
      %36 = sbr.rel (0) target = $region33
    $region32: #{tpu_custom_call.1} parent=1 // pred_region
      _
    $region33: #{tpu_custom_call.1} parent=1 // pred_fallthru
      _
    // Predicated region
    $region34: #{tpu_custom_call.1} parent=1 // pred_check
      _
    $region35: #{tpu_custom_call.1} parent=1 // pred_check_branch
      %38 = sbr.rel (0) target = $region37
    $region36: #{tpu_custom_call.1} parent=1 // pred_region
      _
    $region37: #{tpu_custom_call.1} parent=1 // pred_fallthru
      _
    // Predicated region
    $region38: #{tpu_custom_call.1} parent=1 // pred_check
      _
    $region39: #{tpu_custom_call.1} parent=1 // pred_check_branch
      %40 = sbr.rel (0) target = $region41
    $region40: #{tpu_custom_call.1} parent=1 // pred_region
      _
    $region41: #{tpu_custom_call.1} parent=1 // pred_fallthru
      _
    // Predicated region
    $region42: #{tpu_custom_call.1} parent=1 // pred_check
      _
    $region43: #{tpu_custom_call.1} parent=1 // pred_check_branch
      %42 = sbr.rel (0) target = $region45
    $region44: #{tpu_custom_call.1} parent=1 // pred_region
      _
    $region45: #{tpu_custom_call.1} parent=1 // pred_fallthru
      _
    // Predicated region
    $region46: #{tpu_custom_call.1} parent=1 // pred_check
      _
    $region47: #{tpu_custom_call.1} parent=1 // pred_check_branch
      %44 = sbr.rel (0) target = $region49
    $region48: #{tpu_custom_call.1} parent=1 // pred_region
      _
    $region49: #{tpu_custom_call.1} parent=1 // pred_fallthru
      _
    %v46 = vld [vmem:[%s2] sm:$0x3f]
    %v47 = vld [vmem:[%s0] sm:$0x7]
    %vm48 = vcmp.ne.f32.partialorder %v47, 0.0
    %v49 = vadd.f32 %v46, 1.0
    %v50 = vlog2.pop %v49
    %v51 = vmul.f32 %v50, 0.6931472
    %v52 = vsel %vm48, 1, 0
    %v53 = vlaneseq
    %v54 = vshrl.u32 %v53, 7
    %v55 = vsub.s32 0, %v54
    %v56 = vrot.slane %v52, %v55
    %v57 = vlaneseq
    %v58 = vshrl.u32 %v57, 7
    %v59 = vsub.s32 1, %v58
    %v60 = vrot.slane %v52, %v59
    %v61 = vlaneseq
    %v62 = vshrl.u32 %v61, 7
    %v63 = vsub.s32 2, %v62
    %v64 = vrot.slane %v52, %v63
    %vm65 = vcmp.eq.s32.totalorder %v56, 1
    %vm66 = vcmp.eq.s32.totalorder %v60, 1
    %vm67 = vcmp.eq.s32.totalorder %v64, 1
    %v69 = vcombine.high %v51, %v51
    %v71 = vunpack.c.l.s4 1983009808
    %v72 = vunpack.c.0.s8 %v71
    %v73 = vlaneseq
    %v74 = vshrl.u32 %v73, 7
    %v75 = vsub.s32 %v72, %v74
    %v76 = vrot.slane %v51, %v75
    %v78 = vunpack.c.l.s4 1983009808
    %v79 = vunpack.c.0.s8 %v78
    %v80 = vlaneseq
    %v81 = vshrl.u32 %v80, 7
    %v82 = vsub.s32 %v79, %v81
    %v83 = vrot.slane %v69, %v82
    %v84 = vcombine.high %v76, %v76
    %v89 = vcombine.high %v46, %v46
    %v91 = vunpack.c.l.s4 1983009808
    %v92 = vunpack.c.0.s8 %v91
    %v93 = vlaneseq
    %v94 = vshrl.u32 %v93, 7
    %v95 = vsub.s32 %v92, %v94
    %v96 = vrot.slane %v46, %v95
    %v98 = vunpack.c.l.s4 1983009808
    %v99 = vunpack.c.0.s8 %v98
    %v100 = vlaneseq
    %v101 = vshrl.u32 %v100, 7
    %v102 = vsub.s32 %v99, %v101
    %v103 = vrot.slane %v89, %v102
    %v104 = vcombine.high %v96, %v96
    %v108 = vsel %vm65, %v76, %v96
    %v109 = vsel %vm66, %v84, %v104
    %v110 = vsel %vm67, %v83, %v103
    %v111 = vpack.c.bf16 %v108, %v108
    %v112 = vpack.c.bf16 %v109, %v109
    %v113 = vpack.c.bf16 %v110, %v110
    %v114 = vld [vmem:[%s4] sm:$0xff]
    %v115 = vld [vmem:[%s4 + $0x8] sm:$0xff]
    %v116 = vld [vmem:[%s4 + $0x10] sm:$0xff]
    %v117 = vld [vmem:[%s4 + $0x18] sm:$0xff]
    %v118 = vld [vmem:[%s4 + $0x20] sm:$0xff]
    %v119 = vld [vmem:[%s4 + $0x28] sm:$0xff]
    %v120 = vld [vmem:[%s4 + $0x30] sm:$0xff]
    %v121 = vld [vmem:[%s4 + $0x38] sm:$0xff]
    %v122 = vld [vmem:[%s4 + $0x40] sm:$0xff]
    %v123 = vld [vmem:[%s4 + $0x48] sm:$0xff]
    %v124 = vld [vmem:[%s4 + $0x50] sm:$0xff]
    %v125 = vld [vmem:[%s4 + $0x58] sm:$0xff]
    %v126 = vld [vmem:[%s4 + $0x60] sm:$0xff]
    %v127 = vld [vmem:[%s4 + $0x68] sm:$0xff]
    %v128 = vld [vmem:[%s4 + $0x70] sm:$0xff]
    %v129 = vld [vmem:[%s4 + $0x78] sm:$0xff]
    %v130 = vld [vmem:[%s4 + $0x80] sm:$0xff]
    %v131 = vld [vmem:[%s4 + $0x88] sm:$0xff]
    %v132 = vld [vmem:[%s4 + $0x90] sm:$0xff]
    %v133 = vld [vmem:[%s4 + $0x98] sm:$0xff]
    %v134 = vld [vmem:[%s4 + $0xa0] sm:$0xff]
    %v135 = vld [vmem:[%s4 + $0xa8] sm:$0xff]
    %v136 = vld [vmem:[%s4 + $0xb0] sm:$0xff]
    %v137 = vld [vmem:[%s4 + $0xb8] sm:$0xff]
    %v138 = vld [vmem:[%s4 + $0xc0] sm:$0xff]
    %v139 = vld [vmem:[%s4 + $0xc8] sm:$0xff]
    %v140 = vld [vmem:[%s4 + $0xd0] sm:$0xff]
    %v141 = vld [vmem:[%s4 + $0xd8] sm:$0xff]
    %v142 = vld [vmem:[%s4 + $0xe0] sm:$0xff]
    %v143 = vld [vmem:[%s4 + $0xe8] sm:$0xff]
    %v144 = vld [vmem:[%s4 + $0xf0] sm:$0xff]
    %v145 = vld [vmem:[%s4 + $0xf8] sm:$0xff]
    %v146 = vld [vmem:[%s4 + $0x100] sm:$0xff]
    %v147 = vld [vmem:[%s4 + $0x108] sm:$0xff]
    %v148 = vld [vmem:[%s4 + $0x110] sm:$0xff]
    %v149 = vld [vmem:[%s4 + $0x118] sm:$0xff]
    %v150 = vld [vmem:[%s4 + $0x120] sm:$0xff]
    %v151 = vld [vmem:[%s4 + $0x128] sm:$0xff]
    %v152 = vld [vmem:[%s4 + $0x130] sm:$0xff]
    %v153 = vld [vmem:[%s4 + $0x138] sm:$0xff]
    %v154 = vld [vmem:[%s4 + $0x140] sm:$0xff]
    %v155 = vld [vmem:[%s4 + $0x148] sm:$0xff]
    %v156 = vld [vmem:[%s5] sm:$0x3]
    %v158 = vlaneseq
    %v159 = vshrl.u32 %v158, 7
    %v160 = vsub.s32 0, %v159
    %v161 = vrot.slane %v156, %v160
    %v162 = vlaneseq
    %v163 = vshrl.u32 %v162, 7
    %v164 = vsub.s32 1, %v163
    %v165 = vrot.slane %v156, %v164
    %v210 = vunpack.c.l.b16 %v114
    %v211 = vunpack.c.h.b16 %v114
    %v212 = vunpack.c.l.b16 %v115
    %v213 = vunpack.c.h.b16 %v115
    %v214 = vunpack.c.l.b16 %v116
    %v215 = vunpack.c.h.b16 %v116
    %v216 = vunpack.c.l.b16 %v117
    %v217 = vunpack.c.h.b16 %v117
    %v218 = vunpack.c.l.b16 %v118
    %v219 = vunpack.c.h.b16 %v118
    %v220 = vunpack.c.l.b16 %v119
    %v221 = vunpack.c.h.b16 %v119
    %v222 = vunpack.c.l.b16 %v120
    %v223 = vunpack.c.h.b16 %v120
    %v224 = vunpack.c.l.b16 %v121
    %v225 = vunpack.c.h.b16 %v121
    %v226 = vunpack.c.l.b16 %v122
    %v227 = vunpack.c.h.b16 %v122
    %v228 = vunpack.c.l.b16 %v123
    %v229 = vunpack.c.h.b16 %v123
    %v230 = vunpack.c.l.b16 %v124
    %v231 = vunpack.c.h.b16 %v124
    %v232 = vunpack.c.l.b16 %v125
    %v233 = vunpack.c.h.b16 %v125
    %v234 = vunpack.c.l.b16 %v126
    %v235 = vunpack.c.h.b16 %v126
    %v236 = vunpack.c.l.b16 %v127
    %v237 = vunpack.c.h.b16 %v127
    %v238 = vunpack.c.l.b16 %v128
    %v239 = vunpack.c.h.b16 %v128
    %v240 = vunpack.c.l.b16 %v129
    %v241 = vunpack.c.h.b16 %v129
    %v242 = vunpack.c.l.b16 %v130
    %v243 = vunpack.c.h.b16 %v130
    %v244 = vunpack.c.l.b16 %v131
    %v245 = vunpack.c.h.b16 %v131
    %v246 = vunpack.c.l.b16 %v132
    %v247 = vunpack.c.h.b16 %v132
    %v248 = vunpack.c.l.b16 %v133
    %v249 = vunpack.c.h.b16 %v133
    %v250 = vunpack.c.l.b16 %v134
    %v251 = vunpack.c.h.b16 %v134
    %v252 = vunpack.c.l.b16 %v135
    %v253 = vunpack.c.h.b16 %v135
    %v254 = vunpack.c.l.b16 %v136
    %v255 = vunpack.c.h.b16 %v136
    %v256 = vunpack.c.l.b16 %v137
    %v257 = vunpack.c.h.b16 %v137
    %v258 = vunpack.c.l.b16 %v138
    %v259 = vunpack.c.h.b16 %v138
    %v260 = vunpack.c.l.b16 %v139
    %v261 = vunpack.c.h.b16 %v139
    %v262 = vunpack.c.l.b16 %v140
    %v263 = vunpack.c.h.b16 %v140
    %v264 = vunpack.c.l.b16 %v141
    %v265 = vunpack.c.h.b16 %v141
    %v266 = vunpack.c.l.b16 %v142
    %v267 = vunpack.c.h.b16 %v142
    %v268 = vunpack.c.l.b16 %v143
    %v269 = vunpack.c.h.b16 %v143
    %v270 = vunpack.c.l.b16 %v144
    %v271 = vunpack.c.h.b16 %v144
    %v272 = vunpack.c.l.b16 %v145
    %v273 = vunpack.c.h.b16 %v145
    %v274 = vunpack.c.l.b16 %v146
    %v275 = vunpack.c.h.b16 %v146
    %v276 = vunpack.c.l.b16 %v147
    %v277 = vunpack.c.h.b16 %v147
    %v278 = vunpack.c.l.b16 %v148
    %v279 = vunpack.c.h.b16 %v148
    %v280 = vunpack.c.l.b16 %v149
    %v281 = vunpack.c.h.b16 %v149
    %v282 = vunpack.c.l.b16 %v150
    %v283 = vunpack.c.h.b16 %v150
    %v284 = vunpack.c.l.b16 %v151
    %v285 = vunpack.c.h.b16 %v151
    %v286 = vunpack.c.l.b16 %v152
    %v287 = vunpack.c.h.b16 %v152
    %v288 = vunpack.c.l.b16 %v153
    %v289 = vunpack.c.h.b16 %v153
    %v290 = vunpack.c.l.b16 %v154
    %v291 = vunpack.c.h.b16 %v154
    %v292 = vunpack.c.l.b16 %v155
    %v293 = vunpack.c.h.b16 %v155
    %v294 = vpack.c.b16 %v212, %v210
    %v295 = vpack.c.b16 %v213, %v211
    %v296 = vpack.c.b16 %v216, %v214
    %v297 = vpack.c.b16 %v217, %v215
    %v298 = vpack.c.b16 %v220, %v218
    %v299 = vpack.c.b16 %v221, %v219
    %v300 = vpack.c.b16 %v224, %v222
    %v301 = vpack.c.b16 %v225, %v223
    %v302 = vpack.c.b16 %v228, %v226
    %v303 = vpack.c.b16 %v229, %v227
    %v304 = vpack.c.b16 %v232, %v230
    %v305 = vpack.c.b16 %v233, %v231
    %v306 = vpack.c.b16 %v236, %v234
    %v307 = vpack.c.b16 %v237, %v235
    %v308 = vpack.c.b16 %v240, %v238
    %v309 = vpack.c.b16 %v241, %v239
    %v310 = vpack.c.b16 %v244, %v242
    %v311 = vpack.c.b16 %v245, %v243
    %v312 = vpack.c.b16 %v248, %v246
    %v313 = vpack.c.b16 %v249, %v247
    %v314 = vpack.c.b16 %v252, %v250
    %v315 = vpack.c.b16 %v253, %v251
    %v316 = vpack.c.b16 %v256, %v254
    %v317 = vpack.c.b16 %v257, %v255
    %v318 = vpack.c.b16 %v260, %v258
    %v319 = vpack.c.b16 %v261, %v259
    %v320 = vpack.c.b16 %v264, %v262
    %v321 = vpack.c.b16 %v265, %v263
    %v322 = vpack.c.b16 %v268, %v266
    %v323 = vpack.c.b16 %v269, %v267
    %v324 = vpack.c.b16 %v272, %v270
    %v325 = vpack.c.b16 %v273, %v271
    %v326 = vpack.c.b16 %v276, %v274
    %v327 = vpack.c.b16 %v277, %v275
    %v328 = vpack.c.b16 %v280, %v278
    %v329 = vpack.c.b16 %v281, %v279
    %v330 = vpack.c.b16 %v284, %v282
    %v331 = vpack.c.b16 %v285, %v283
    %v332 = vpack.c.b16 %v288, %v286
    %v333 = vpack.c.b16 %v289, %v287
    %v334 = vpack.c.b16 %v292, %v290
    %v335 = vpack.c.b16 %v293, %v291
    %vm376 = vcmask 646144
    %v378 = vsel %vm376, %v113, 0
    %vm380 = vcmask 1046528
    %vm381 = vcmask 1047552
    %v382 = vsel %vm380, 4294967295, 65535
    %v383 = vsel %vm381, %v382, 0
    %v385 = vand.u32 %v334, %v383
    %v388 = vand.u32 %v335, %v383
    %390 = vmatprep.subr.bf16.mxu0 %v295
    %391 = vmatpush1.bf16.msra.mxu0 %v294
    %392 = vmatprep.subr.bf16.mxu0 %v297
    %393 = vmatpush1.bf16.msra.mxu0 %v296
    %394 = vmatprep.subr.bf16.mxu0 %v299
    %395 = vmatpush1.bf16.msra.mxu0 %v298
    %396 = vmatprep.subr.bf16.mxu0 %v301
    %397 = vmatpush1.bf16.msra.mxu0 %v300
    %398 = vmatprep.subr.bf16.mxu0 %v303
    %399 = vmatpush1.bf16.msra.mxu0 %v302
    %400 = vmatprep.subr.bf16.mxu0 %v305
    %401 = vmatpush1.bf16.msra.mxu0 %v304
    %402 = vmatprep.subr.bf16.mxu0 %v307
    %403 = vmatpush1.bf16.msra.mxu0 %v306
    %404 = vmatprep.subr.bf16.mxu0 %v309
    %405 = vmatpush1.bf16.msra.mxu0 %v308
    %406 = vmatprep.subr.bf16.mxu0 %v311
    %407 = vmatpush1.bf16.msra.mxu0 %v310
    %408 = vmatprep.subr.bf16.mxu0 %v313
    %409 = vmatpush1.bf16.msra.mxu0 %v312
    %410 = vmatprep.subr.bf16.mxu0 %v315
    %411 = vmatpush1.bf16.msra.mxu0 %v314
    %412 = vmatprep.subr.bf16.mxu0 %v317
    %413 = vmatpush1.bf16.msra.mxu0 %v316
    %414 = vmatprep.subr.bf16.mxu0 %v319
    %415 = vmatpush1.bf16.msra.mxu0 %v318
    %416 = vmatprep.subr.bf16.mxu0 %v321
    %417 = vmatpush1.bf16.msra.mxu0 %v320
    %418 = vmatprep.subr.bf16.mxu0 %v323
    %419 = vmatpush1.bf16.msra.mxu0 %v322
    %420 = vmatprep.subr.bf16.mxu0 %v325
    %421 = vmatpush1.bf16.msra.mxu0 %v324
    %422 = vmatprep.mubr.bf16.mxu0 %v112
    %423 = vmatmul.mubr.bf16.gmra.mrb[0].mxu0 %v111
    %v424 = vpop.f32.mrb[0].mxu0
    %v425 = vadd.f32 %v161, %v424
    %v426 = vpop.f32.mrb[0].mxu0
    %v427 = vadd.f32 %v165, %v426
    %v428 = vpop.f32.mrb[0].mxu0
    %v429 = vpop.f32.mrb[0].mxu0
    %430 = vdwg.mxu0
    %431 = vmatprep.subr.bf16.mxu0 %v327
    %432 = vmatpush1.bf16.msra.mxu0 %v326
    %433 = vmatprep.subr.bf16.mxu0 %v329
    %434 = vmatpush1.bf16.msra.mxu0 %v328
    %435 = vmatprep.subr.bf16.mxu0 %v331
    %436 = vmatpush1.bf16.msra.mxu0 %v330
    %437 = vmatprep.subr.bf16.mxu0 %v333
    %438 = vmatpush1.bf16.msra.mxu0 %v332
    %439 = vmatprep.subr.bf16.mxu0 %v388
    %440 = vmatpush1.bf16.msra.mxu0 %v385
    %441 = vmatprep.subr.bf16.mxu0 0
    %442 = vmatpush1.bf16.msra.mxu0 0
    %443 = vmatprep.subr.bf16.mxu0 0
    %444 = vmatpush1.bf16.msra.mxu0 0
    %445 = vmatprep.subr.bf16.mxu0 0
    %446 = vmatpush1.bf16.msra.mxu0 0
    %447 = vmatprep.subr.bf16.mxu0 0
    %448 = vmatpush1.bf16.msra.mxu0 0
    %449 = vmatprep.subr.bf16.mxu0 0
    %450 = vmatpush1.bf16.msra.mxu0 0
    %451 = vmatprep.subr.bf16.mxu0 0
    %452 = vmatpush1.bf16.msra.mxu0 0
    %453 = vmatprep.subr.bf16.mxu0 0
    %454 = vmatpush1.bf16.msra.mxu0 0
    %455 = vmatprep.subr.bf16.mxu0 0
    %456 = vmatpush1.bf16.msra.mxu0 0
    %457 = vmatprep.subr.bf16.mxu0 0
    %458 = vmatpush1.bf16.msra.mxu0 0
    %459 = vmatprep.subr.bf16.mxu0 0
    %460 = vmatpush1.bf16.msra.mxu0 0
    %461 = vmatprep.subr.bf16.mxu0 0
    %462 = vmatpush1.bf16.msra.mxu0 0
    %463 = vmatprep.mubr.bf16.mxu0 0
    %464 = vmatmul.mubr.bf16.gmra.mrb[0].mxu0 %v378
    %v465 = vpop.f32.mrb[0].mxu0
    %v466 = vadd.f32 %v425, %v465
    %v467 = vpop.f32.mrb[0].mxu0
    %v468 = vadd.f32 %v427, %v467
    %v469 = vpop.f32.mrb[0].mxu0
    %v470 = vpop.f32.mrb[0].mxu0
    %471 = vdwg.mxu0
    %v472 = vmax.f32 %v466, 0.0
    %v473 = vmax.f32 %v468, 0.0
    %v474 = vpack.c.bf16 %v472, %v472
    %v475 = vpack.c.bf16 %v473, %v473
    %v476 = vld [vmem:[%s8] sm:$0xff]
    %v477 = vld [vmem:[%s8 + $0x8] sm:$0xff]
    %v478 = vld [vmem:[%s8 + $0x10] sm:$0xff]
    %v479 = vld [vmem:[%s8 + $0x18] sm:$0xff]
    %v480 = vld [vmem:[%s8 + $0x20] sm:$0xff]
    %v481 = vld [vmem:[%s8 + $0x28] sm:$0xff]
    %v482 = vld [vmem:[%s8 + $0x30] sm:$0xff]
    %v483 = vld [vmem:[%s8 + $0x38] sm:$0xff]
    %v484 = vld [vmem:[%s8 + $0x40] sm:$0xff]
    %v485 = vld [vmem:[%s8 + $0x48] sm:$0xff]
    %v486 = vld [vmem:[%s8 + $0x50] sm:$0xff]
    %v487 = vld [vmem:[%s8 + $0x58] sm:$0xff]
    %v488 = vld [vmem:[%s8 + $0x60] sm:$0xff]
    %v489 = vld [vmem:[%s8 + $0x68] sm:$0xff]
    %v490 = vld [vmem:[%s8 + $0x70] sm:$0xff]
    %v491 = vld [vmem:[%s8 + $0x78] sm:$0xff]
    %v492 = vld [vmem:[%s8 + $0x80] sm:$0xff]
    %v493 = vld [vmem:[%s8 + $0x88] sm:$0xff]
    %v494 = vld [vmem:[%s8 + $0x90] sm:$0xff]
    %v495 = vld [vmem:[%s8 + $0x98] sm:$0xff]
    %v496 = vld [vmem:[%s8 + $0xa0] sm:$0xff]
    %v497 = vld [vmem:[%s8 + $0xa8] sm:$0xff]
    %v498 = vld [vmem:[%s8 + $0xb0] sm:$0xff]
    %v499 = vld [vmem:[%s8 + $0xb8] sm:$0xff]
    %v500 = vld [vmem:[%s9] sm:$0x3]
    %v502 = vlaneseq
    %v503 = vshrl.u32 %v502, 7
    %v504 = vsub.s32 0, %v503
    %v505 = vrot.slane %v500, %v504
    %v506 = vlaneseq
    %v507 = vshrl.u32 %v506, 7
    %v508 = vsub.s32 1, %v507
    %v509 = vrot.slane %v500, %v508
    %v536 = vunpack.c.l.b16 %v476
    %v537 = vunpack.c.h.b16 %v476
    %v538 = vunpack.c.l.b16 %v477
    %v539 = vunpack.c.h.b16 %v477
    %v540 = vunpack.c.l.b16 %v478
    %v541 = vunpack.c.h.b16 %v478
    %v542 = vunpack.c.l.b16 %v479
    %v543 = vunpack.c.h.b16 %v479
    %v544 = vunpack.c.l.b16 %v480
    %v545 = vunpack.c.h.b16 %v480
    %v546 = vunpack.c.l.b16 %v481
    %v547 = vunpack.c.h.b16 %v481
    %v548 = vunpack.c.l.b16 %v482
    %v549 = vunpack.c.h.b16 %v482
    %v550 = vunpack.c.l.b16 %v483
    %v551 = vunpack.c.h.b16 %v483
    %v552 = vunpack.c.l.b16 %v484
    %v553 = vunpack.c.h.b16 %v484
    %v554 = vunpack.c.l.b16 %v485
    %v555 = vunpack.c.h.b16 %v485
    %v556 = vunpack.c.l.b16 %v486
    %v557 = vunpack.c.h.b16 %v486
    %v558 = vunpack.c.l.b16 %v487
    %v559 = vunpack.c.h.b16 %v487
    %v560 = vunpack.c.l.b16 %v488
    %v561 = vunpack.c.h.b16 %v488
    %v562 = vunpack.c.l.b16 %v489
    %v563 = vunpack.c.h.b16 %v489
    %v564 = vunpack.c.l.b16 %v490
    %v565 = vunpack.c.h.b16 %v490
    %v566 = vunpack.c.l.b16 %v491
    %v567 = vunpack.c.h.b16 %v491
    %v568 = vunpack.c.l.b16 %v492
    %v569 = vunpack.c.h.b16 %v492
    %v570 = vunpack.c.l.b16 %v493
    %v571 = vunpack.c.h.b16 %v493
    %v572 = vunpack.c.l.b16 %v494
    %v573 = vunpack.c.h.b16 %v494
    %v574 = vunpack.c.l.b16 %v495
    %v575 = vunpack.c.h.b16 %v495
    %v576 = vunpack.c.l.b16 %v496
    %v577 = vunpack.c.h.b16 %v496
    %v578 = vunpack.c.l.b16 %v497
    %v579 = vunpack.c.h.b16 %v497
    %v580 = vunpack.c.l.b16 %v498
    %v581 = vunpack.c.h.b16 %v498
    %v582 = vunpack.c.l.b16 %v499
    %v583 = vunpack.c.h.b16 %v499
    %v584 = vpack.c.b16 %v538, %v536
    %v585 = vpack.c.b16 %v539, %v537
    %v586 = vpack.c.b16 %v542, %v540
    %v587 = vpack.c.b16 %v543, %v541
    %v588 = vpack.c.b16 %v546, %v544
    %v589 = vpack.c.b16 %v547, %v545
    %v590 = vpack.c.b16 %v550, %v548
    %v591 = vpack.c.b16 %v551, %v549
    %v592 = vpack.c.b16 %v554, %v552
    %v593 = vpack.c.b16 %v555, %v553
    %v594 = vpack.c.b16 %v558, %v556
    %v595 = vpack.c.b16 %v559, %v557
    %v596 = vpack.c.b16 %v562, %v560
    %v597 = vpack.c.b16 %v563, %v561
    %v598 = vpack.c.b16 %v566, %v564
    %v599 = vpack.c.b16 %v567, %v565
    %v600 = vpack.c.b16 %v570, %v568
    %v601 = vpack.c.b16 %v571, %v569
    %v602 = vpack.c.b16 %v574, %v572
    %v603 = vpack.c.b16 %v575, %v573
    %v604 = vpack.c.b16 %v578, %v576
    %v605 = vpack.c.b16 %v579, %v577
    %v606 = vpack.c.b16 %v582, %v580
    %v607 = vpack.c.b16 %v583, %v581
    %vm632 = vcmask 523264
    %v634 = vsel %vm632, %v475, 0
    %636 = vmatprep.subr.bf16.mxu0 %v585
    %637 = vmatpush1.bf16.msra.mxu0 %v584
    %638 = vmatprep.subr.bf16.mxu0 %v587
    %639 = vmatpush1.bf16.msra.mxu0 %v586
    %640 = vmatprep.subr.bf16.mxu0 %v589
    %641 = vmatpush1.bf16.msra.mxu0 %v588
    %642 = vmatprep.subr.bf16.mxu0 %v591
    %643 = vmatpush1.bf16.msra.mxu0 %v590
    %644 = vmatprep.subr.bf16.mxu0 %v593
    %645 = vmatpush1.bf16.msra.mxu0 %v592
    %646 = vmatprep.subr.bf16.mxu0 %v595
    %647 = vmatpush1.bf16.msra.mxu0 %v594
    %648 = vmatprep.subr.bf16.mxu0 %v597
    %649 = vmatpush1.bf16.msra.mxu0 %v596
    %650 = vmatprep.subr.bf16.mxu0 %v599
    %651 = vmatpush1.bf16.msra.mxu0 %v598
    %652 = vmatprep.subr.bf16.mxu0 %v601
    %653 = vmatpush1.bf16.msra.mxu0 %v600
    %654 = vmatprep.subr.bf16.mxu0 %v603
    %655 = vmatpush1.bf16.msra.mxu0 %v602
    %656 = vmatprep.subr.bf16.mxu0 %v605
    %657 = vmatpush1.bf16.msra.mxu0 %v604
    %658 = vmatprep.subr.bf16.mxu0 %v607
    %659 = vmatpush1.bf16.msra.mxu0 %v606
    %660 = vmatprep.subr.bf16.mxu0 0
    %661 = vmatpush1.bf16.msra.mxu0 0
    %662 = vmatprep.subr.bf16.mxu0 0
    %663 = vmatpush1.bf16.msra.mxu0 0
    %664 = vmatprep.subr.bf16.mxu0 0
    %665 = vmatpush1.bf16.msra.mxu0 0
    %666 = vmatprep.subr.bf16.mxu0 0
    %667 = vmatpush1.bf16.msra.mxu0 0
    %668 = vmatprep.mubr.bf16.mxu0 %v634
    %669 = vmatmul.mubr.bf16.gmra.mrb[0].mxu0 %v474
    %v670 = vpop.f32.mrb[0].mxu0
    %v671 = vadd.f32 %v505, %v670
    %v672 = vpop.f32.mrb[0].mxu0
    %v673 = vadd.f32 %v509, %v672
    %v674 = vpop.f32.mrb[0].mxu0
    %v675 = vpop.f32.mrb[0].mxu0
    %676 = vdwg.mxu0
    %v677 = vmax.f32 %v671, 0.0
    %v678 = vmax.f32 %v673, 0.0
    %v681 = vcombine.low %v677, %v678
    %v683 = vunpack.c.l.s4 1983009808
    %v684 = vunpack.c.0.s8 %v683
    %v685 = vlaneseq
    %v686 = vshrl.u32 %v685, 7
    %v687 = vsub.s32 %v684, %v686
    %v688 = vrot.slane %v681, %v687
    %690 = vst [vmem:[#allocation2] sm:$0xf] %v688
    %v691 = vld [vmem:[%s3] sm:$0xff]
    %v692 = vld [vmem:[%s3 + $0x8] sm:$0x3]
    %v693 = vld [vmem:[%s1] sm:$0x1]
    %vm694 = vcmp.ne.f32.partialorder %v693, 0.0
    %v695 = vadd.f32 %v691, 1.0
    %v696 = vadd.f32 %v692, 1.0
    %v697 = vlog2.pop %v695
    %v698 = vmul.f32 %v697, 0.6931472
    %v699 = vlog2.pop %v696
    %v700 = vmul.f32 %v699, 0.6931472
    %v701 = vsel %vm694, 1, 0
    %v702 = vlaneseq
    %v703 = vshrl.u32 %v702, 7
    %v704 = vsub.s32 0, %v703
    %v705 = vrot.slane %v701, %v704
    %vm706 = vcmp.eq.s32.totalorder %v705, 1
    %v707 = vsel %vm706, %v698, %v691
    %v708 = vsel %vm706, %v700, %v692
    %v709 = vpack.c.bf16 %v708, %v707
    %v710 = vld [vmem:[%s6] sm:$0xff]
    %v711 = vld [vmem:[%s6 + $0x8] sm:$0xff]
    %v712 = vld [vmem:[%s6 + $0x10] sm:$0xff]
    %v713 = vld [vmem:[%s6 + $0x18] sm:$0xff]
    %v714 = vld [vmem:[%s6 + $0x20] sm:$0xff]
    %v715 = vld [vmem:[%s6 + $0x28] sm:$0xff]
    %v716 = vld [vmem:[%s6 + $0x30] sm:$0xff]
    %v717 = vld [vmem:[%s6 + $0x38] sm:$0xff]
    %v718 = vld [vmem:[%s6 + $0x40] sm:$0x33]
    %v719 = vld [vmem:[%s7] sm:$0x3]
    %v721 = vlaneseq
    %v722 = vshrl.u32 %v721, 7
    %v723 = vsub.s32 0, %v722
    %v724 = vrot.slane %v719, %v723
    %v725 = vlaneseq
    %v726 = vshrl.u32 %v725, 7
    %v727 = vsub.s32 1, %v726
    %v728 = vrot.slane %v719, %v727
    %v740 = vunpack.c.l.b16 %v710
    %v741 = vunpack.c.h.b16 %v710
    %v742 = vunpack.c.l.b16 %v711
    %v743 = vunpack.c.h.b16 %v711
    %v744 = vunpack.c.l.b16 %v712
    %v745 = vunpack.c.h.b16 %v712
    %v746 = vunpack.c.l.b16 %v713
    %v747 = vunpack.c.h.b16 %v713
    %v748 = vunpack.c.l.b16 %v714
    %v749 = vunpack.c.h.b16 %v714
    %v750 = vunpack.c.l.b16 %v715
    %v751 = vunpack.c.h.b16 %v715
    %v752 = vunpack.c.l.b16 %v716
    %v753 = vunpack.c.h.b16 %v716
    %v754 = vunpack.c.l.b16 %v717
    %v755 = vunpack.c.h.b16 %v717
    %v756 = vunpack.c.l.b16 %v718
    %v757 = vunpack.c.h.b16 %v718
    %v758 = vpack.c.b16 %v742, %v740
    %v759 = vpack.c.b16 %v743, %v741
    %v760 = vpack.c.b16 %v746, %v744
    %v761 = vpack.c.b16 %v747, %v745
    %v762 = vpack.c.b16 %v750, %v748
    %v763 = vpack.c.b16 %v751, %v749
    %v764 = vpack.c.b16 %v754, %v752
    %v765 = vpack.c.b16 %v755, %v753
    %v766 = vpack.c.b16 %v756, %v756
    %v767 = vpack.c.b16 %v757, %v757
    %vm776 = vcmask 547840
    %v778 = vsel %vm776, %v709, 0
    %vm780 = vcmask 1040384
    %vm781 = vcmask 1041408
    %v782 = vsel %vm780, 4294967295, 65535
    %v783 = vsel %vm781, %v782, 0
    %v785 = vand.u32 %v766, %v783
    %v788 = vand.u32 %v767, %v783
    %790 = vmatprep.subr.bf16.mxu0 %v759
    %791 = vmatpush1.bf16.msra.mxu0 %v758
    %792 = vmatprep.subr.bf16.mxu0 %v761
    %793 = vmatpush1.bf16.msra.mxu0 %v760
    %794 = vmatprep.subr.bf16.mxu0 %v763
    %795 = vmatpush1.bf16.msra.mxu0 %v762
    %796 = vmatprep.subr.bf16.mxu0 %v765
    %797 = vmatpush1.bf16.msra.mxu0 %v764
    %798 = vmatprep.subr.bf16.mxu0 %v788
    %799 = vmatpush1.bf16.msra.mxu0 %v785
    %800 = vmatprep.subr.bf16.mxu0 0
    %801 = vmatpush1.bf16.msra.mxu0 0
    %802 = vmatprep.subr.bf16.mxu0 0
    %803 = vmatpush1.bf16.msra.mxu0 0
    %804 = vmatprep.subr.bf16.mxu0 0
    %805 = vmatpush1.bf16.msra.mxu0 0
    %806 = vmatprep.subr.bf16.mxu0 0
    %807 = vmatpush1.bf16.msra.mxu0 0
    %808 = vmatprep.subr.bf16.mxu0 0
    %809 = vmatpush1.bf16.msra.mxu0 0
    %810 = vmatprep.subr.bf16.mxu0 0
    %811 = vmatpush1.bf16.msra.mxu0 0
    %812 = vmatprep.subr.bf16.mxu0 0
    %813 = vmatpush1.bf16.msra.mxu0 0
    %814 = vmatprep.subr.bf16.mxu0 0
    %815 = vmatpush1.bf16.msra.mxu0 0
    %816 = vmatprep.subr.bf16.mxu0 0
    %817 = vmatpush1.bf16.msra.mxu0 0
    %818 = vmatprep.subr.bf16.mxu0 0
    %819 = vmatpush1.bf16.msra.mxu0 0
    %820 = vmatprep.subr.bf16.mxu0 0
    %821 = vmatpush1.bf16.msra.mxu0 0
    %822 = vmatprep.mubr.bf16.mxu0 0
    %823 = vmatmul.mubr.bf16.gmra.mrb[0].mxu0 %v778
    %v824 = vpop.f32.mrb[0].mxu0
    %v825 = vadd.f32 %v724, %v824
    %v826 = vpop.f32.mrb[0].mxu0
    %v827 = vadd.f32 %v728, %v826
    %v828 = vpop.f32.mrb[0].mxu0
    %v829 = vadd.f32 %v724, %v828
    %v830 = vpop.f32.mrb[0].mxu0
    %v831 = vadd.f32 %v728, %v830
    %832 = vdwg.mxu0
    %v833 = vmax.f32 %v825, 0.0
    %v834 = vmax.f32 %v827, 0.0
    %v835 = vmax.f32 %v829, 0.0
    %v836 = vmax.f32 %v831, 0.0
    %v837 = vpack.c.bf16 %v835, %v833
    %v838 = vpack.c.bf16 %v836, %v834
    %v839 = vld [vmem:[%s10] sm:$0xf]
    %v840 = vld [vmem:[%s10 + $0x4] sm:$0xf]
    %v841 = vld [vmem:[%s10 + $0x8] sm:$0xf]
    %v842 = vld [vmem:[%s10 + $0xc] sm:$0xf]
    %v843 = vld [vmem:[%s10 + $0x10] sm:$0xf]
    %v844 = vld [vmem:[%s10 + $0x14] sm:$0xf]
    %v845 = vld [vmem:[%s10 + $0x18] sm:$0xf]
    %v846 = vld [vmem:[%s10 + $0x1c] sm:$0xf]
    %v847 = vld [vmem:[%s10 + $0x20] sm:$0xf]
    %v848 = vld [vmem:[%s10 + $0x24] sm:$0xf]
    %v849 = vld [vmem:[%s10 + $0x28] sm:$0xf]
    %v850 = vld [vmem:[%s10 + $0x2c] sm:$0xf]
    %v851 = vld [vmem:[%s10 + $0x30] sm:$0xf]
    %v852 = vld [vmem:[%s10 + $0x34] sm:$0xf]
    %v853 = vld [vmem:[%s10 + $0x38] sm:$0xf]
    %v854 = vld [vmem:[%s10 + $0x3c] sm:$0xf]
    %v855 = vld [vmem:[%s10 + $0x40] sm:$0xf]
    %v856 = vld [vmem:[%s10 + $0x44] sm:$0xf]
    %v857 = vld [vmem:[%s10 + $0x48] sm:$0xf]
    %v858 = vld [vmem:[%s10 + $0x4c] sm:$0xf]
    %v859 = vld [vmem:[%s10 + $0x50] sm:$0xf]
    %v860 = vld [vmem:[%s10 + $0x54] sm:$0xf]
    %v861 = vld [vmem:[%s10 + $0x58] sm:$0xf]
    %v862 = vld [vmem:[%s10 + $0x5c] sm:$0xf]
    %v863 = vld [vmem:[%s11] sm:$0x1]
    %v865 = vlaneseq
    %v866 = vshrl.u32 %v865, 7
    %v867 = vsub.s32 0, %v866
    %v868 = vrot.slane %v863, %v867
    %v894 = vunpack.c.l.b16 %v839
    %v895 = vunpack.c.l.b16 %v840
    %v896 = vunpack.c.l.b16 %v841
    %v897 = vunpack.c.l.b16 %v842
    %v898 = vunpack.c.l.b16 %v843
    %v899 = vunpack.c.l.b16 %v844
    %v900 = vunpack.c.l.b16 %v845
    %v901 = vunpack.c.l.b16 %v846
    %v902 = vunpack.c.l.b16 %v847
    %v903 = vunpack.c.l.b16 %v848
    %v904 = vunpack.c.l.b16 %v849
    %v905 = vunpack.c.l.b16 %v850
    %v906 = vunpack.c.l.b16 %v851
    %v907 = vunpack.c.l.b16 %v852
    %v908 = vunpack.c.l.b16 %v853
    %v909 = vunpack.c.l.b16 %v854
    %v910 = vunpack.c.l.b16 %v855
    %v911 = vunpack.c.l.b16 %v856
    %v912 = vunpack.c.l.b16 %v857
    %v913 = vunpack.c.l.b16 %v858
    %v914 = vunpack.c.l.b16 %v859
    %v915 = vunpack.c.l.b16 %v860
    %v916 = vunpack.c.l.b16 %v861
    %v917 = vunpack.c.l.b16 %v862
    %v918 = vpack.c.b16 %v895, %v894
    %v919 = vpack.c.b16 %v897, %v896
    %v920 = vpack.c.b16 %v899, %v898
    %v921 = vpack.c.b16 %v901, %v900
    %v922 = vpack.c.b16 %v903, %v902
    %v923 = vpack.c.b16 %v905, %v904
    %v924 = vpack.c.b16 %v907, %v906
    %v925 = vpack.c.b16 %v909, %v908
    %v926 = vpack.c.b16 %v911, %v910
    %v927 = vpack.c.b16 %v913, %v912
    %v928 = vpack.c.b16 %v915, %v914
    %v929 = vpack.c.b16 %v917, %v916
    %v943 = vsel %vm632, %v838, 0
    %945 = vmatprep.subr.bf16.mxu0 0
    %946 = vmatpush1.bf16.msra.mxu0 %v918
    %947 = vmatprep.subr.bf16.mxu0 0
    %948 = vmatpush1.bf16.msra.mxu0 %v919
    %949 = vmatprep.subr.bf16.mxu0 0
    %950 = vmatpush1.bf16.msra.mxu0 %v920
    %951 = vmatprep.subr.bf16.mxu0 0
    %952 = vmatpush1.bf16.msra.mxu0 %v921
    %953 = vmatprep.subr.bf16.mxu0 0
    %954 = vmatpush1.bf16.msra.mxu0 %v922
    %955 = vmatprep.subr.bf16.mxu0 0
    %956 = vmatpush1.bf16.msra.mxu0 %v923
    %957 = vmatprep.subr.bf16.mxu0 0
    %958 = vmatpush1.bf16.msra.mxu0 %v924
    %959 = vmatprep.subr.bf16.mxu0 0
    %960 = vmatpush1.bf16.msra.mxu0 %v925
    %961 = vmatprep.subr.bf16.mxu0 0
    %962 = vmatpush1.bf16.msra.mxu0 %v926
    %963 = vmatprep.subr.bf16.mxu0 0
    %964 = vmatpush1.bf16.msra.mxu0 %v927
    %965 = vmatprep.subr.bf16.mxu0 0
    %966 = vmatpush1.bf16.msra.mxu0 %v928
    %967 = vmatprep.subr.bf16.mxu0 0
    %968 = vmatpush1.bf16.msra.mxu0 %v929
    %969 = vmatprep.subr.bf16.mxu0 0
    %970 = vmatpush1.bf16.msra.mxu0 0
    %971 = vmatprep.subr.bf16.mxu0 0
    %972 = vmatpush1.bf16.msra.mxu0 0
    %973 = vmatprep.subr.bf16.mxu0 0
    %974 = vmatpush1.bf16.msra.mxu0 0
    %975 = vmatprep.subr.bf16.mxu0 0
    %976 = vmatpush1.bf16.msra.mxu0 0
    %977 = vmatprep.mubr.bf16.mxu0 %v943
    %978 = vmatmul.mubr.bf16.gmra.mrb[0].mxu0 %v837
    %v979 = vpop.f32.mrb[0].mxu0
    %v980 = vadd.f32 %v868, %v979
    %v981 = vpop.f32.mrb[0].mxu0
    %v982 = vpop.f32.mrb[0].mxu0
    %v983 = vadd.f32 %v868, %v982
    %v984 = vpop.f32.mrb[0].mxu0
    %985 = vdwg.mxu0
    %v986 = vmax.f32 %v980, 0.0
    %v987 = vmax.f32 %v983, 0.0
    %988 = vst [vmem:[#allocation4] sm:$0xff] %v986
    %989 = vst [vmem:[#allocation4 + $0x8] sm:$0x3] %v987
    // Predicated region
    $region50: #{tpu_custom_call.1} parent=1 // pred_check
      _
    $region51: #{tpu_custom_call.1} parent=1 // pred_check_branch
      %991 = sbr.rel (0) target = $region53
    $region52: #{tpu_custom_call.1} parent=1 // pred_region
      %s993 = ssub.s32 64, 64
      %994 = vsyncadd [#allocation3], %s993
      %s996 = sshll.u32 [#allocation2], 4
      %s997 = int_to_ptr.vmem [resolvable:$true] %s996
      %999 = dma.vmem_to_hbm [thread:$0]  %s997, 64, %s12, [#allocation3]
    $region53: #{tpu_custom_call.1} parent=1 // pred_fallthru
      _
    // Predicated region
    $region54: #{tpu_custom_call.1} parent=1 // pred_check
      _
    $region55: #{tpu_custom_call.1} parent=1 // pred_check_branch
      %1001 = sbr.rel (0) target = $region57
    $region56: #{tpu_custom_call.1} parent=1 // pred_region
      %s1003 = ssub.s32 256, 256
      %1004 = vsyncadd [#allocation5], %s1003
      %s1005 = sshll.u32 [#allocation4], 4
      %s1006 = int_to_ptr.vmem [resolvable:$true] %s1005
      %1011 = dma.vmem_to_hbm [thread:$0]  %s1006, 256, %s13, [#allocation5], 128, 128, 8
    $region57: #{tpu_custom_call.1} parent=1 // pred_fallthru
      _
    // Predicated region
    $region58: #{tpu_custom_call.1} parent=1 // pred_check
      _
    $region59: #{tpu_custom_call.1} parent=1 // pred_check_branch
      %1013 = sbr.rel (0) target = $region61
    $region60: #{tpu_custom_call.1} parent=1 // pred_region
      %1014 = dma.done [#allocation3], 64
    $region61: #{tpu_custom_call.1} parent=1 // pred_fallthru
      _
    // Predicated region
    $region62: #{tpu_custom_call.1} parent=1 // pred_check
      _
    $region63: #{tpu_custom_call.1} parent=1 // pred_check_branch
      %1016 = sbr.rel (0) target = $region65
    $region64: #{tpu_custom_call.1} parent=1 // pred_region
      %1017 = dma.done [#allocation5], 256
    $region65: #{tpu_custom_call.1} parent=1 // pred_fallthru
      _
    %1018 = vsyncpa [#allocation3], 1
    %1019 = vsyncpa [#allocation5], 1

</llo_original>
